<compile_context>
chip_gen: v7x
topology: tpu7x:2x2x1
jax: 0.10.0
libtpu: 0.0.40
codegen_flags: <defaults>
</compile_context>

<pallas_src>
import functools

import jax
import jax.numpy as jnp
from jax.experimental import pallas as pl
from jax.experimental.pallas import tpu as pltpu

_LANE = 128
_SPLIT_MIN_K_STEPS = 4      # min K steps before splitting the reduction across 2 TCs


# ----------------------------------------------------------------------------
# Hardware / tiling / VMEM helpers.
# ----------------------------------------------------------------------------
@functools.lru_cache(maxsize=1)
def _vmem_capacity_bytes():
    """Physical VMEM per TensorCore; conservative fallback if the query fails."""
    try:
        info = pltpu.get_tpu_info()
        for attr in ("vmem_capacity_bytes", "vmem_bytes", "vmem_size_bytes"):
            v = getattr(info, attr, None)
            if v:
                return int(v)
    except Exception:
        pass
    return 64 * 1024 * 1024   # v7x per-TC size: safe lower bound on every gen


def _pick_tk(n, l, itemsize, tk=None):
    """Adaptive K-slab width.

    Largest lane-aligned slab such that one (N, tk) feature buffer stays within
    ~1/16 of physical VMEM (~8 MiB on v5e/v6e, ~4 MiB on v7x): fewer grid steps
    (amortizes ~0.35 us/step), longer contiguous DMA segments.  A caller-given
    `tk` overrides the heuristic (used by the tests to force multi-step paths).
    """
    if tk is None:
        slab_budget = max(2 * 1024 * 1024, _vmem_capacity_bytes() // 16)
        tk = max(_LANE, slab_budget // max(1, n * itemsize))
    if l <= tk:
        return l, 1                                    # full axis: always legal
    tk_eff = max(_LANE, (min(tk, l) // _LANE) * _LANE)  # lane-aligned slab
    return tk_eff, pl.cdiv(l, tk_eff)


def _vmem_limit_bytes(n, tk_eff, itemsize, with_target):
    """Scoped-VMEM budget: double-buffered (N, tk) feature slabs + resident f32
    Gram block (+ resident target block for the fused MSE path) + headroom for
    compiler-internal scratch.  Capped at 75% of physical VMEM."""
    need = 2 * n * tk_eff * itemsize          # double-buffered feature inputs
    need += n * n * 4                         # resident f32 Gram block
    if with_target:
        need += n * n * 4 + 4096              # resident target block + (1,1) loss
    need += 2 * 1024 * 1024                   # compiler-internal scratch headroom
    cap = (_vmem_capacity_bytes() * 3) // 4
    return int(min(max(need, 16 * 1024 * 1024), cap))


# ----------------------------------------------------------------------------
# Kernel bodies.
# ----------------------------------------------------------------------------
def _accumulate_slab(feat_ref, g_ref, *, k_global, num_k, true_l, has_phantom):
    """g_ref += F_slab @ F_slab^T for the current K slab.

    The ragged-column mask (iota + compare + select) only runs on the final K
    block; all other steps take the unmasked fast path.  Phantom steps (odd K
    split across 2 cores) are skipped entirely.
    """
    tk = feat_ref.shape[-1]
    needs_mask = (true_l % tk) != 0           # static: ragged last K block?
    real = (k_global < num_k) if has_phantom else None

    def _and_real(cond):
        return cond if real is None else jnp.logical_and(cond, real)

    def _dot(f):
        # Contract the lane-aligned last axis of both operands: no transpose,
        # MXU accumulates in f32 regardless of the feature dtype.
        return jax.lax.dot_general(
            f, f, dimension_numbers=(((1,), (1,)), ((), ())),
            preferred_element_type=jnp.float32)

    if needs_mask:
        is_ragged = k_global == num_k - 1

        @pl.when(_and_real(is_ragged))
        def _():
            f = feat_ref[...]
            col = k_global * tk + jax.lax.broadcasted_iota(jnp.int32, f.shape, 1)
            f = jnp.where(col < true_l, f, jnp.zeros_like(f))
            g_ref[...] += _dot(f)

        @pl.when(_and_real(jnp.logical_not(is_ragged)))
        def _():
            g_ref[...] += _dot(feat_ref[...])
    elif has_phantom:
        @pl.when(real)
        def _():
            g_ref[...] += _dot(feat_ref[...])
    else:
        g_ref[...] += _dot(feat_ref[...])


def _gram_partial_kernel(feat_ref, g_ref, *, inv_scale, true_l, num_k,
                         k_per_core, has_phantom):
    """Per-core partial Gram: grid = (ncores 'parallel', k_per_core 'arbitrary').
    Each core accumulates its K range into its own resident (N, N) block and
    scales it by inv_scale at its last step (sum of scaled partials == G)."""
    c = pl.program_id(0)
    k = pl.program_id(1)
    k_global = c * k_per_core + k

    @pl.when(k == 0)
    def _():
        g_ref[...] = jnp.zeros_like(g_ref)

    _accumulate_slab(feat_ref, g_ref, k_global=k_global, num_k=num_k,
                     true_l=true_l, has_phantom=has_phantom)

    @pl.when(k == k_per_core - 1)
    def _():
        g_ref[...] = g_ref[...] * inv_scale


def _gram_mse_kernel(feat_ref, t_ref, loss_ref, g_scratch,
                     *, inv_scale, true_l, num_k):
    """Fully fused forward (single-core path): accumulate G in VMEM scratch
    (never written to HBM) and emit only the (1, 1) MSE vs. the target Gram."""
    k = pl.program_id(0)

    @pl.when(k == 0)
    def _():
        g_scratch[...] = jnp.zeros_like(g_scratch)

    _accumulate_slab(feat_ref, g_scratch, k_global=k, num_k=num_k,
                     true_l=true_l, has_phantom=False)

    @pl.when(k == num_k - 1)
    def _():
        g = g_scratch[...] * inv_scale
        diff = g - t_ref[...].astype(jnp.float32)
        inv_nn = 1.0 / float(g.shape[0] * g.shape[1])
        loss_ref[...] = (jnp.sum(diff * diff) * inv_nn).reshape(1, 1)


# ----------------------------------------------------------------------------
# pallas_call wrappers.
# ----------------------------------------------------------------------------
def _gram_partials_call(feats, inv_scale, *, tk=None):
    """Run the partial-Gram kernel.  Returns (ncores, N, N) scaled partials
    whose sum over axis 0 is the Gram matrix (ncores == 1 when the reduction
    is too short to split across v7x's two TensorCores)."""
    n, l = feats.shape
    itemsize = feats.dtype.itemsize
    tk_eff, num_k = _pick_tk(n, l, itemsize, tk)

    ncores = 2 if num_k >= _SPLIT_MIN_K_STEPS else 1
    k_per_core = pl.cdiv(num_k, ncores)
    has_phantom = (ncores * k_per_core) != num_k   # odd split -> one skipped step

    def feat_index_map(c, k):
        kg = c * k_per_core + k
        if has_phantom:
            kg = jnp.minimum(kg, num_k - 1)        # clamp phantom; skipped in-kernel
        return (0, kg)

    kernel = functools.partial(
        _gram_partial_kernel, inv_scale=inv_scale, true_l=l, num_k=num_k,
        k_per_core=k_per_core, has_phantom=has_phantom)

    cost = pl.CostEstimate(
        flops=2 * n * n * l, transcendentals=0,
        bytes_accessed=n * l * itemsize + ncores * n * n * 4)

    return pl.pallas_call(
        kernel,
        out_shape=jax.ShapeDtypeStruct((ncores, n, n), jnp.float32),
        grid_spec=pltpu.PrefetchScalarGridSpec(
            num_scalar_prefetch=0,
            grid=(ncores, k_per_core),
            in_specs=[pl.BlockSpec((n, tk_eff), feat_index_map)],
            out_specs=pl.BlockSpec((None, n, n), lambda c, k: (c, 0, 0)),
        ),
        compiler_params=pltpu.CompilerParams(
            dimension_semantics=("parallel", "arbitrary"),
            vmem_limit_bytes=_vmem_limit_bytes(n, tk_eff, itemsize,
                                               with_target=False)),
        cost_estimate=cost,
    )(feats)


def gram_matrix(x, *, tk=None, compute_dtype=None):
    """G = (X.reshape(B*C, H*W) @ X.reshape(B*C, H*W).T) / (B*C*H*W)."""
    b, c, h, w = x.shape
    n, l = b * c, h * w
    feats = x.reshape(n, l)                       # no pad copy
    if compute_dtype is not None:                 # optional bf16 streaming
        feats = feats.astype(compute_dtype)
    inv_scale = 1.0 / float(b * c * h * w)
    partials = _gram_partials_call(feats, inv_scale, tk=tk)
    if partials.shape[0] == 1:
        return partials.reshape(n, n)
    return jnp.sum(partials, axis=0)              # tiny cross-core finalize


def style_loss(x, target_gram, *, tk=None, compute_dtype=None):
    """Forward pass: loss = mean((gram_matrix(x) - target_gram)^2)."""
    b, c, h, w = x.shape
    n, l = b * c, h * w
    feats = x.reshape(n, l)
    if compute_dtype is not None:
        feats = feats.astype(compute_dtype)
    inv_scale = 1.0 / float(b * c * h * w)
    itemsize = feats.dtype.itemsize
    tk_eff, num_k = _pick_tk(n, l, itemsize, tk)

    if num_k >= _SPLIT_MIN_K_STEPS:
        # Long reduction: split K across the two v7x TensorCores; the (N, N)
        # sum + MSE finalize is negligible XLA work.
        partials = _gram_partials_call(feats, inv_scale, tk=tk)
        g = jnp.sum(partials, axis=0)
        diff = g - target_gram.astype(jnp.float32)
        return jnp.mean(diff * diff)

    # Short reduction: single fused pallas_call; Gram lives only in VMEM
    # scratch (no discarded HBM writeback), only the (1, 1) loss is emitted.
    kernel = functools.partial(_gram_mse_kernel, inv_scale=inv_scale,
                               true_l=l, num_k=num_k)
    cost = pl.CostEstimate(
        flops=2 * n * n * l + 3 * n * n, transcendentals=0,
        bytes_accessed=n * l * itemsize + n * n * 4 + 4)
    loss = pl.pallas_call(
        kernel,
        out_shape=jax.ShapeDtypeStruct((1, 1), jnp.float32),
        grid_spec=pltpu.PrefetchScalarGridSpec(
            num_scalar_prefetch=0,
            grid=(num_k,),
            in_specs=[pl.BlockSpec((n, tk_eff), lambda k: (0, k)),
                      pl.BlockSpec((n, n), lambda k: (0, 0))],
            out_specs=pl.BlockSpec((1, 1), lambda k: (0, 0)),
            scratch_shapes=[pltpu.VMEM((n, n), jnp.float32)],
        ),
        compiler_params=pltpu.CompilerParams(
            dimension_semantics=("arbitrary",),
            vmem_limit_bytes=_vmem_limit_bytes(n, tk_eff, itemsize,
                                               with_target=True)),
        cost_estimate=cost,
    )(feats, target_gram)
    return loss[0, 0]


# ----------------------------------------------------------------------------
# StyleLoss module (forward semantics identical to the PyTorch module:
# computes Gram of input, stores MSE vs. target Gram in self.loss,
# returns the input unchanged).
# ----------------------------------------------------------------------------
class StyleLoss:
    def __init__(self, target_feature):
        self.target = gram_matrix(target_feature)        # detached Gram target
        # F.mse_loss(target, target) is identically zero; skip the kernel launch.
        self.loss = jnp.zeros((), jnp.float32)

    def __call__(self, x):
        self.loss = style_loss(x, self.target)
        return x

    forward = __call__


# ----------------------------------------------------------------------------
# Pure-JAX reference for verification.
# ----------------------------------------------------------------------------
def _gram_ref(x):
    b, c, h, w = x.shape
    f = x.reshape(b * c, h * w).astype(jnp.float32)
    return (f @ f.T) / float(b * c * h * w)


if __name__ == "__main__":
    key = jax.random.PRNGKey(0)
    k1, k2, k3, k4, k5 = jax.random.split(key, 5)

    # --- Module-consistent small shapes: NCHW feature maps. -----------------
    target_feature = jax.random.normal(k1, (2, 4, 16, 16), dtype=jnp.float32)
    x = jax.random.normal(k2, (2, 4, 16, 16), dtype=jnp.float32)

    mod = StyleLoss(target_feature)
    out = jax.block_until_ready(mod(x))
    loss = jax.block_until_ready(mod.loss)

    g_ref = _gram_ref(x)
    t_ref = _gram_ref(target_feature)
    loss_ref = jnp.mean((g_ref - t_ref) ** 2)

    assert out.shape == x.shape
    assert jnp.allclose(out, x)                               # identity output
    assert jnp.allclose(gram_matrix(x), g_ref, atol=1e-5, rtol=1e-5)
    assert jnp.allclose(loss, loss_ref, atol=1e-6, rtol=1e-5)

    # --- Multi-step + ragged-K mask, no core split (num_k = 2 < 4). ---------
    x_ragged = jax.random.normal(k3, (2, 4, 12, 12), dtype=jnp.float32)   # L=144
    g_ragged = jax.block_until_ready(gram_matrix(x_ragged, tk=128))
    assert jnp.allclose(g_ragged, _gram_ref(x_ragged), atol=1e-5, rtol=1e-5)

    # --- Core-split path with a phantom step (num_k = 5, odd). --------------
    x_split = jax.random.normal(k4, (1, 16, 20, 32), dtype=jnp.float32)   # L=640
    g_split = jax.block_until_ready(gram_matrix(x_split, tk=128))
    assert jnp.allclose(g_split, _gram_ref(x_split), atol=1e-4, rtol=1e-3)
    t_split = gram_matrix(x_split, tk=128)
    x_split2 = jax.random.normal(k5, (1, 16, 20, 32), dtype=jnp.float32)
    loss_split = jax.block_until_ready(style_loss(x_split2, t_split, tk=128))
    loss_split_ref = jnp.mean((_gram_ref(x_split2) - _gram_ref(x_split)) ** 2)
    assert jnp.allclose(loss_split, loss_split_ref, atol=1e-6, rtol=1e-3)

    # --- Core-split, even K, ragged last block (num_k = 4, L = 400). --------
    x_even = jax.random.normal(k5, (1, 16, 20, 20), dtype=jnp.float32)
    g_even = jax.block_until_ready(gram_matrix(x_even, tk=128))
    assert jnp.allclose(g_even, _gram_ref(x_even), atol=1e-4, rtol=1e-3)

    # --- Optional bf16 feature streaming (MXU still accumulates in f32). ----
    g_bf16 = jax.block_until_ready(gram_matrix(x, compute_dtype=jnp.bfloat16))
    assert jnp.allclose(g_bf16, g_ref, atol=5e-2, rtol=1e-1)

    print("KERNEL_OK")
</pallas_src>

<mosaic_0001>
module attributes {stable_mosaic.version = 11 : i64} {
  func.func @_gram_partial_kernel(%arg0: i32, %arg1: i32, %arg2: memref<8x256xf32, #tpu.memory_space<vmem>>, %arg3: memref<1x8x8xf32, #tpu.memory_space<vmem>>) attributes {dimension_semantics = [#tpu.dimension_semantics<parallel>, #tpu.dimension_semantics<arbitrary>], iteration_bounds = array<i64: 1, 1>, scalar_prefetch = 0 : i64, scratch_operands = 0 : i64, tpu.core_type = #tpu.core_type<tc>, window_params = [{transform_indices = @transform_0, window_bounds = array<i64: 8, 256>}, {transform_indices = @transform_1, window_bounds = array<i64: 1, 8, 8>}]} {
    %c0_i32 = arith.constant 0 : i32
    %0 = arith.cmpi eq, %arg1, %c0_i32 : i32
    %1 = arith.extui %0 : i1 to i32
    %c0_i32_0 = arith.constant 0 : i32
    %2 = arith.cmpi ne, %1, %c0_i32_0 : i32
    scf.if %2 {
      %cst_10 = arith.constant 0.000000e+00 : f32
      %14 = vector.broadcast %cst_10 : f32 to vector<8x8xf32>
      %c0_11 = arith.constant 0 : index
      %c0_12 = arith.constant 0 : index
      %c0_13 = arith.constant 0 : index
      %15 = vector.load %arg3[%c0_11, %c0_12, %c0_13] : memref<1x8x8xf32, #tpu.memory_space<vmem>>, vector<1x8x8xf32>
      %16 = vector.shape_cast %15 : vector<1x8x8xf32> to vector<8x8xf32>
      %17 = vector.shape_cast %14 : vector<8x8xf32> to vector<1x8x8xf32>
      tpu.vector_store %arg3[%c0_11, %c0_12, %c0_13], %17 {strides = array<i32>} : memref<1x8x8xf32, #tpu.memory_space<vmem>>, vector<1x8x8xf32>,
    } else {
    }
    %c0 = arith.constant 0 : index
    %c0_1 = arith.constant 0 : index
    %c0_2 = arith.constant 0 : index
    %3 = vector.load %arg3[%c0, %c0_1, %c0_2] : memref<1x8x8xf32, #tpu.memory_space<vmem>>, vector<1x8x8xf32>
    %4 = vector.shape_cast %3 : vector<1x8x8xf32> to vector<8x8xf32>
    %c0_3 = arith.constant 0 : index
    %c0_4 = arith.constant 0 : index
    %5 = vector.load %arg2[%c0_3, %c0_4] : memref<8x256xf32, #tpu.memory_space<vmem>>, vector<8x256xf32>
    %cst = arith.constant dense<0.000000e+00> : vector<8x8xf32>
    %6 = tpu.matmul %5, %5, %cst {dimension_numbers = #tpu.dot_dimension_numbers<[1], [1], [0], [0], [0, 0, 1, 0], [], []>} : vector<8x256xf32>, vector<8x256xf32>, vector<8x8xf32> -> vector<8x8xf32>
    %7 = arith.addf %4, %6 : vector<8x8xf32>
    %c0_5 = arith.constant 0 : index
    %c0_6 = arith.constant 0 : index
    %c0_7 = arith.constant 0 : index
    %8 = vector.load %arg3[%c0_5, %c0_6, %c0_7] : memref<1x8x8xf32, #tpu.memory_space<vmem>>, vector<1x8x8xf32>
    %9 = vector.shape_cast %8 : vector<1x8x8xf32> to vector<8x8xf32>
    %10 = vector.shape_cast %7 : vector<8x8xf32> to vector<1x8x8xf32>
    tpu.vector_store %arg3[%c0_5, %c0_6, %c0_7], %10 {strides = array<i32>} : memref<1x8x8xf32, #tpu.memory_space<vmem>>, vector<1x8x8xf32>,
    %c0_i32_8 = arith.constant 0 : i32
    %11 = arith.cmpi eq, %arg1, %c0_i32_8 : i32
    %12 = arith.extui %11 : i1 to i32
    %c0_i32_9 = arith.constant 0 : i32
    %13 = arith.cmpi ne, %12, %c0_i32_9 : i32
    scf.if %13 {
      %c0_10 = arith.constant 0 : index
      %c0_11 = arith.constant 0 : index
      %c0_12 = arith.constant 0 : index
      %14 = vector.load %arg3[%c0_10, %c0_11, %c0_12] : memref<1x8x8xf32, #tpu.memory_space<vmem>>, vector<1x8x8xf32>
      %15 = vector.shape_cast %14 : vector<1x8x8xf32> to vector<8x8xf32>
      %cst_13 = arith.constant 4.8828125E-4 : f32
      %16 = vector.broadcast %cst_13 : f32 to vector<8x8xf32>
      %17 = arith.mulf %15, %16 : vector<8x8xf32>
      %c0_14 = arith.constant 0 : index
      %c0_15 = arith.constant 0 : index
      %c0_16 = arith.constant 0 : index
      %18 = vector.load %arg3[%c0_14, %c0_15, %c0_16] : memref<1x8x8xf32, #tpu.memory_space<vmem>>, vector<1x8x8xf32>
      %19 = vector.shape_cast %18 : vector<1x8x8xf32> to vector<8x8xf32>
      %20 = vector.shape_cast %17 : vector<8x8xf32> to vector<1x8x8xf32>
      tpu.vector_store %arg3[%c0_14, %c0_15, %c0_16], %20 {strides = array<i32>} : memref<1x8x8xf32, #tpu.memory_space<vmem>>, vector<1x8x8xf32>,
    } else {
    }
    return
  }
  func.func @transform_0(%arg0: i32, %arg1: i32) -> (i32, i32) {
    %c1_i32 = arith.constant 1 : i32
    %0 = arith.muli %arg0, %c1_i32 : i32
    %1 = arith.addi %0, %arg1 : i32
    %c0_i32 = arith.constant 0 : i32
    %c0_i32_0 = arith.constant 0 : i32
    return %c0_i32, %1 : i32, i32
  }
  func.func @transform_1(%arg0: i32, %arg1: i32) -> (i32, i32, i32) {
    %c0_i32 = arith.constant 0 : i32
    %c0_i32_0 = arith.constant 0 : i32
    %c0_i32_1 = arith.constant 0 : i32
    return %arg0, %c0_i32, %c0_i32_0 : i32, i32, i32
  }
}

</mosaic_0001>

<llo_original>
// kernel: tpu_custom_call.1
$region0: #{tpu_custom_call.1}
  #allocation0 [shape = 'u32[]', space=smem, size = 0x4, offset = 0x4, fixed_abs, tag = 'smem constant byte address 0x4 - core index']
  #allocation1 [shape = 'u32[144,128]{1,0:T(1,128)}', space=vmem, size = 0x12000, scoped, tag = 'internal scratch']
  %s0 = inlined_call_operand.hbm [shape: f32[8,256], index: 0, kind: input, shape index: {}]
  %s1 = inlined_call_operand.hbm [shape: f32[1,8,8], index: 1, kind: output, shape index: {}]
  %s2 = sld [smem:[#allocation0]]
  $region26: #{tpu_custom_call.1} parent=0
    _
  %s4 = ssub.s32 1, %s2
  %s5 = scalar_select 0, %s4, %s2
  $region1: #{tpu_custom_call.1} parent=0
    #allocation2 [shape = 'u8[8192]{0}', space=vmem, size = 0x2000, scoped, tag = 'input window, operand 0, single buffered']
    #allocation3 [shape = 's32[1]{0}', space=sflag, size = 0x4, scoped, tag = 'scoped memory for tpu_custom_call.1']
    #allocation4 [shape = 's32[1]{0}', space=sflag, size = 0x4, scoped, tag = 'scoped memory for tpu_custom_call.1']
    #allocation5 [shape = 'u8[4096]{0}', space=vmem, size = 0x1000, scoped, tag = 'output window, operand 0, single buffered']
    %6 = vsyncpa [#allocation3], 0
    %7 = vsyncpa [#allocation4], 0
    // Predicated region
    $region2: #{tpu_custom_call.1} parent=1 // pred_check
      _
    $region3: #{tpu_custom_call.1} parent=1 // pred_check_branch
      %9 = sbr.rel (0) target = $region5
    $region4: #{tpu_custom_call.1} parent=1 // pred_region
      %s10 = sadd.s32 0, 0
      %s11 = smul.u32 2, %s10
      %s13 = ssub.s32 256, 256
      %14 = vsyncadd [#allocation3], %s13
      %s15 = smul.addr %s11, 128
      %s16 = scalar_lea.hbm %s0, %s15
      %s18 = sshll.u32 [#allocation2], 4
      %s19 = int_to_ptr.vmem [resolvable:$true] %s18
      %21 = dma.hbm_to_vmem [thread:$0]  %s16, 256, %s19, [#allocation3]
    $region5: #{tpu_custom_call.1} parent=1 // pred_fallthru
      _
    // Predicated region
    $region6: #{tpu_custom_call.1} parent=1 // pred_check
      _
    $region7: #{tpu_custom_call.1} parent=1 // pred_check_branch
      %23 = sbr.rel (0) target = $region9
    $region8: #{tpu_custom_call.1} parent=1 // pred_region
      %24 = dma.done [#allocation3], 256
    $region9: #{tpu_custom_call.1} parent=1 // pred_fallthru
      _
    %s25 = sadd.s32 0, 0
    %s26 = smul.u32 2, %s25
    %p27 = scmp.eq.s32.totalorder 0, 0
    // Predicated region
    $region10: #{tpu_custom_call.1} parent=1 // pred_check
      %p28 = pneg %p27
    $region11: #{tpu_custom_call.1} parent=1 // pred_check_branch
      %30 = sbr.rel (%p28) target = $region13
    $region12: #{tpu_custom_call.1} parent=1 // pred_region
      %vm31 = vcmask 64512
      %32 = vst.msk [vmem:[#allocation5] sm:$0xff] %vm31, 0.0
    $region13: #{tpu_custom_call.1} parent=1 // pred_fallthru
      _
    %v33 = vld [vmem:[#allocation5] sm:$0xff]
    %v34 = vld [vmem:[#allocation2] sm:$0xff]
    %v35 = vld [vmem:[#allocation2 + $0x8] sm:$0xff]
    %36 = vmatprep.subr.mxu0 %v35
    %37 = vmatpush1.xpose.msra.mxu0 %v34
    %38 = vmatprep.subr.mxu0 0.0
    %39 = vmatpush1.xpose.msra.mxu0 0.0
    %40 = vmatprep.subr.mxu0 0.0
    %41 = vmatpush1.xpose.msra.mxu0 0.0
    %42 = vmatprep.subr.mxu0 0.0
    %43 = vmatpush1.xpose.msra.mxu0 0.0
    %44 = vmatprep.subr.mxu0 0.0
    %45 = vmatpush1.xpose.msra.mxu0 0.0
    %46 = vmatprep.subr.mxu0 0.0
    %47 = vmatpush1.xpose.msra.mxu0 0.0
    %48 = vmatprep.subr.mxu0 0.0
    %49 = vmatpush1.xpose.msra.mxu0 0.0
    %50 = vmatprep.subr.mxu0 0.0
    %51 = vmatpush1.xpose.msra.mxu0 0.0
    %52 = vmatprep.subr.mxu0 0.0
    %53 = vmatpush1.xpose.msra.mxu0 0.0
    %54 = vmatprep.subr.mxu0 0.0
    %55 = vmatpush1.xpose.msra.mxu0 0.0
    %56 = vmatprep.subr.mxu0 0.0
    %57 = vmatpush1.xpose.msra.mxu0 0.0
    %58 = vmatprep.subr.mxu0 0.0
    %59 = vmatpush1.xpose.msra.mxu0 0.0
    %60 = vmatprep.subr.mxu0 0.0
    %61 = vmatpush1.xpose.msra.mxu0 0.0
    %62 = vmatprep.subr.mxu0 0.0
    %63 = vmatpush1.xpose.msra.mxu0 0.0
    %64 = vmatprep.subr.mxu0 0.0
    %65 = vmatpush1.xpose.msra.mxu0 0.0
    %66 = vmatprep.subr.mxu0 0.0
    %67 = vmatpush1.xpose.msra.mxu0 0.0
    %68 = vmatprep.subr.mxu0 0.0
    %69 = vmatpush1.xpose.msra.mxu0 0.0
    %70 = vmatprep.subr.mxu0 0.0
    %71 = vmatpush1.xpose.msra.mxu0 0.0
    %72 = vmatprep.subr.mxu0 0.0
    %73 = vmatpush1.xpose.msra.mxu0 0.0
    %74 = vmatprep.subr.mxu0 0.0
    %75 = vmatpush1.xpose.msra.mxu0 0.0
    %76 = vmatprep.subr.mxu0 0.0
    %77 = vmatpush1.xpose.msra.mxu0 0.0
    %78 = vmatprep.subr.mxu0 0.0
    %79 = vmatpush1.xpose.msra.mxu0 0.0
    %80 = vmatprep.subr.mxu0 0.0
    %81 = vmatpush1.xpose.msra.mxu0 0.0
    %82 = vmatprep.subr.mxu0 0.0
    %83 = vmatpush1.xpose.msra.mxu0 0.0
    %84 = vmatprep.subr.mxu0 0.0
    %85 = vmatpush1.xpose.msra.mxu0 0.0
    %86 = vmatprep.subr.mxu0 0.0
    %87 = vmatpush1.xpose.msra.mxu0 0.0
    %88 = vmatprep.subr.mxu0 0.0
    %89 = vmatpush1.xpose.msra.mxu0 0.0
    %90 = vmatprep.subr.mxu0 0.0
    %91 = vmatpush1.xpose.msra.mxu0 0.0
    %92 = vmatprep.subr.mxu0 0.0
    %93 = vmatpush1.xpose.msra.mxu0 0.0
    %94 = vmatprep.subr.mxu0 0.0
    %95 = vmatpush1.xpose.msra.mxu0 0.0
    %96 = vmatprep.subr.mxu0 0.0
    %97 = vmatpush1.xpose.msra.mxu0 0.0
    %98 = vmatprep.subr.mxu0 0.0
    %99 = vmatpush1.xpose.msra.mxu0 0.0
    %100 = vmatprep.mubr.f32.mxu0 %v35
    %101 = vmatmul.mubr.f32.gmra.mrb[0].mxu0 %v34
    %v102 = vpop.f32.mrb[0].mxu0
    %v103 = vadd.f32 0.0, %v102
    %v104 = vpop.f32.mrb[0].mxu0
    %105 = vdwg.mxu0
    %v106 = vadd.f32 %v33, %v103
    %vm107 = vcmask 64512
    %108 = vst.msk [vmem:[#allocation5] sm:$0xff] %vm107, %v106
    // Predicated region
    $region14: #{tpu_custom_call.1} parent=1 // pred_check
      %p109 = pneg %p27
    $region15: #{tpu_custom_call.1} parent=1 // pred_check_branch
      %111 = sbr.rel (%p109) target = $region17
    $region16: #{tpu_custom_call.1} parent=1 // pred_region
      %v112 = vld [vmem:[#allocation5] sm:$0xff]
      %v113 = vmul.f32 %v112, 0.00048828125
      %114 = vst.msk [vmem:[#allocation5] sm:$0xff] %vm107, %v113
    $region17: #{tpu_custom_call.1} parent=1 // pred_fallthru
      _
    // Predicated region
    $region18: #{tpu_custom_call.1} parent=1 // pred_check
      _
    $region19: #{tpu_custom_call.1} parent=1 // pred_check_branch
      %116 = sbr.rel (0) target = $region21
    $region20: #{tpu_custom_call.1} parent=1 // pred_region
      %s118 = ssub.s32 128, 128
      %119 = vsyncadd [#allocation4], %s118
      %s121 = sshll.u32 [#allocation5], 4
      %s122 = int_to_ptr.vmem [resolvable:$true] %s121
      %124 = dma.vmem_to_hbm [thread:$0]  %s122, 128, %s1, [#allocation4]
    $region21: #{tpu_custom_call.1} parent=1 // pred_fallthru
      _
    // Predicated region
    $region22: #{tpu_custom_call.1} parent=1 // pred_check
      _
    $region23: #{tpu_custom_call.1} parent=1 // pred_check_branch
      %126 = sbr.rel (0) target = $region25
    $region24: #{tpu_custom_call.1} parent=1 // pred_region
      %127 = dma.done [#allocation4], 128
    $region25: #{tpu_custom_call.1} parent=1 // pred_fallthru
      _
    %128 = vsyncpa [#allocation3], 1
    %129 = vsyncpa [#allocation4], 1

</llo_original>
